<compile_context>
chip_gen: v6e
topology: v6e:2x2x1
jax: 0.10.0
libtpu: 0.0.40
codegen_flags: <defaults>
</compile_context>

<pallas_src>
import functools

import jax
import jax.numpy as jnp
from jax.experimental import pallas as pl
from jax.experimental.pallas import tpu as pltpu

_LANE = 128    # vreg lane width
_SUBLANE = 8   # vreg sublane count (f32)


def _round_up(x, m):
    return ((x + m - 1) // m) * m


def _pad2(a, shape):
    """Zero-pad a 2-D array up to `shape` (rows, cols)."""
    r, c = a.shape
    R, C = shape
    if (r, c) == (R, C):
        return a
    return jnp.pad(a, ((0, R - r), (0, C - c)))


def _mlp_kernel(x_ref, w1_ref, b1_ref, w2_ref, b2_ref, w3_ref, b3_ref, o_ref):
    # Fused 3-layer MLP on one (TB, in_f) batch tile. Weights/biases use
    # constant index_maps, so they stay VMEM-resident across grid steps.
    # MXU operands are cast in-kernel to the weight dtype (f32 or bf16);
    # accumulation is always f32; bias-add + ReLU run in f32 on the VPU.
    x = x_ref[...].astype(w1_ref.dtype)
    h1 = jnp.dot(x, w1_ref[...], preferred_element_type=jnp.float32) + b1_ref[...]
    h1 = jnp.maximum(h1, 0.0)
    h2 = jnp.dot(h1.astype(w2_ref.dtype), w2_ref[...],
                 preferred_element_type=jnp.float32) + b2_ref[...]
    h2 = jnp.maximum(h2, 0.0)
    out = jnp.dot(h2.astype(w3_ref.dtype), w3_ref[...],
                  preferred_element_type=jnp.float32) + b3_ref[...]
    o_ref[...] = out.astype(o_ref.dtype)


def prepare_params(w1, b1, w2, b2, w3, b3, *, compute_dtype=jnp.float32):
    """One-time padding/casting of parameters (hoisted out of the forward path).

    Hidden dim is padded to 128 lanes; the output dim is left at its true size
    (out_f is the full last dim of the output block, which is legal and avoids
    64x-inflated writeback). Biases stay f32 (added post-accumulate).
    """
    in_f, hid = w1.shape
    out_f = w3.shape[1]
    hid_p = _round_up(max(hid, _LANE), _LANE)
    w1p = _pad2(w1, (in_f, hid_p)).astype(compute_dtype)
    b1p = _pad2(b1, (1, hid_p)).astype(jnp.float32)
    w2p = _pad2(w2, (hid_p, hid_p)).astype(compute_dtype)
    b2p = _pad2(b2, (1, hid_p)).astype(jnp.float32)
    w3p = _pad2(w3, (hid_p, out_f)).astype(compute_dtype)
    b3p = b3.astype(jnp.float32)
    return (w1p, b1p, w2p, b2p, w3p, b3p)


@functools.partial(jax.jit, static_argnames=("block_batch",))
def mlp_forward(x, params, *, block_batch=2048):
    """Fused MLP forward as a batch-gridded Pallas kernel.

    x:      (B, input_size) f32 (stays f32 in HBM; cast in-kernel if bf16 weights)
    params: output of prepare_params()
    returns (B, output_size) f32
    """
    w1p, b1p, w2p, b2p, w3p, b3p = params
    B, in_f = x.shape
    hid_p = w2p.shape[0]
    out_f = w3p.shape[1]

    # Batch tile: sublane-aligned (16 for bf16 packing), capped at block_batch
    # AND at ceil(B/2) so the grid has >= 2 steps whenever B is large enough —
    # this lets the "parallel" batch axis shard across both v7x TensorCores.
    # Trailing partial tile handled by the cdiv grid (output store is masked).
    sub = 16 if w1p.dtype == jnp.bfloat16 else _SUBLANE
    if B <= sub:
        TB = B                                   # full-dim block (legal for any B)
    else:
        half = _round_up(pl.cdiv(B, 2), sub)
        TB = min(_round_up(block_batch, sub), half)
    grid = (pl.cdiv(B, TB),)

    # Honest scheduler hint: real HBM traffic (x + params + native-size output).
    flops = 2 * B * (in_f * hid_p + hid_p * hid_p + hid_p * out_f)
    bytes_accessed = int(x.size) * x.dtype.itemsize
    bytes_accessed += sum(int(a.size) * a.dtype.itemsize
                          for a in (w1p, b1p, w2p, b2p, w3p, b3p))
    bytes_accessed += B * out_f * 4

    return pl.pallas_call(
        _mlp_kernel,
        out_shape=jax.ShapeDtypeStruct((B, out_f), jnp.float32),
        grid=grid,
        in_specs=[
            pl.BlockSpec((TB, in_f), lambda i: (i, 0)),       # x: tiled over batch
            pl.BlockSpec((in_f, hid_p), lambda i: (0, 0)),    # w1: VMEM-resident
            pl.BlockSpec((1, hid_p), lambda i: (0, 0)),       # b1
            pl.BlockSpec((hid_p, hid_p), lambda i: (0, 0)),   # w2
            pl.BlockSpec((1, hid_p), lambda i: (0, 0)),       # b2
            pl.BlockSpec((hid_p, out_f), lambda i: (0, 0)),   # w3
            pl.BlockSpec((1, out_f), lambda i: (0, 0)),       # b3
        ],
        out_specs=pl.BlockSpec((TB, out_f), lambda i: (i, 0)),  # native out_f width
        compiler_params=pltpu.CompilerParams(
            dimension_semantics=("parallel",)),
        cost_estimate=pl.CostEstimate(flops=flops,
                                      transcendentals=0,
                                      bytes_accessed=bytes_accessed),
    )(x, w1p, b1p, w2p, b2p, w3p, b3p)


def init_params(key, input_size, hidden_size, output_size):
    """Deterministic PyTorch-style (uniform +-1/sqrt(fan_in)) initialization."""
    ks = jax.random.split(key, 6)

    def linear(kw, kb, fan_in, fan_out):
        bound = 1.0 / jnp.sqrt(jnp.float32(fan_in))
        w = jax.random.uniform(kw, (fan_in, fan_out), jnp.float32, -bound, bound)
        b = jax.random.uniform(kb, (1, fan_out), jnp.float32, -bound, bound)
        return w, b

    w1, b1 = linear(ks[0], ks[1], input_size, hidden_size)
    w2, b2 = linear(ks[2], ks[3], hidden_size, hidden_size)
    w3, b3 = linear(ks[4], ks[5], hidden_size, output_size)
    return w1, b1, w2, b2, w3, b3


if __name__ == "__main__":
    # Small shapes consistent with the module: a laser-scan vector in,
    # (angle, speed) out.
    batch = 2
    input_size = 32
    hidden_size = 32
    output_size = 2

    key = jax.random.PRNGKey(0)
    k_x, k_x2, k_p = jax.random.split(key, 3)
    x = jax.random.normal(k_x, (batch, input_size), dtype=jnp.float32)
    w1, b1, w2, b2, w3, b3 = init_params(k_p, input_size, hidden_size, output_size)

    def ref_fwd(xx):
        h = jnp.maximum(xx @ w1 + b1, 0.0)
        h = jnp.maximum(h @ w2 + b2, 0.0)
        return h @ w3 + b3

    # TODO(synk): training pieces (Adam optimizer, MSELoss in compute_loss) are
    # host-side PyTorch utilities, not part of the forward pass — not ported.

    # f32 path, single grid step (B <= 8 -> full-dim batch block).
    params_f32 = prepare_params(w1, b1, w2, b2, w3, b3)
    out = jax.block_until_ready(mlp_forward(x, params_f32))
    assert out.shape == (batch, output_size)
    assert jnp.allclose(out, ref_fwd(x), atol=1e-5, rtol=1e-5)

    # Multi-step grid with a partial trailing batch tile (B=20, TB=8 -> 3 steps).
    x_big = jax.random.normal(k_x2, (20, input_size), dtype=jnp.float32)
    out_big = jax.block_until_ready(mlp_forward(x_big, params_f32, block_batch=8))
    assert out_big.shape == (20, output_size)
    assert jnp.allclose(out_big, ref_fwd(x_big), atol=1e-5, rtol=1e-5)

    # Optional bf16-MXU operand path (f32 accumulation), looser tolerance.
    params_bf16 = prepare_params(w1, b1, w2, b2, w3, b3,
                                 compute_dtype=jnp.bfloat16)
    out_bf16 = jax.block_until_ready(
        mlp_forward(x_big, params_bf16, block_batch=16))
    assert jnp.allclose(out_bf16, ref_fwd(x_big), atol=5e-2, rtol=5e-2)

    print("KERNEL_OK")
</pallas_src>

<mosaic_0001>
module attributes {stable_mosaic.version = 11 : i64} {
  func.func @_mlp_kernel(%arg0: i32, %arg1: memref<2x32xf32, #tpu.memory_space<vmem>>, %arg2: memref<32x128xf32, #tpu.memory_space<vmem>>, %arg3: memref<1x128xf32, #tpu.memory_space<vmem>>, %arg4: memref<128x128xf32, #tpu.memory_space<vmem>>, %arg5: memref<1x128xf32, #tpu.memory_space<vmem>>, %arg6: memref<128x2xf32, #tpu.memory_space<vmem>>, %arg7: memref<1x2xf32, #tpu.memory_space<vmem>>, %arg8: memref<2x2xf32, #tpu.memory_space<vmem>>) attributes {dimension_semantics = [#tpu.dimension_semantics<parallel>], iteration_bounds = array<i64: 1>, scalar_prefetch = 0 : i64, scratch_operands = 0 : i64, tpu.core_type = #tpu.core_type<tc>, window_params = [{transform_indices = @transform_0, window_bounds = array<i64: 2, 32>}, {pipeline_mode = #tpu.pipeline_mode<synchronous>, transform_indices = @transform_1, window_bounds = array<i64: 32, 128>}, {pipeline_mode = #tpu.pipeline_mode<synchronous>, transform_indices = @transform_2, window_bounds = array<i64: 1, 128>}, {pipeline_mode = #tpu.pipeline_mode<synchronous>, transform_indices = @transform_3, window_bounds = array<i64: 128, 128>}, {pipeline_mode = #tpu.pipeline_mode<synchronous>, transform_indices = @transform_4, window_bounds = array<i64: 1, 128>}, {pipeline_mode = #tpu.pipeline_mode<synchronous>, transform_indices = @transform_5, window_bounds = array<i64: 128, 2>}, {pipeline_mode = #tpu.pipeline_mode<synchronous>, transform_indices = @transform_6, window_bounds = array<i64: 1, 2>}, {transform_indices = @transform_7, window_bounds = array<i64: 2, 2>}]} {
    %c0 = arith.constant 0 : index
    %c0_0 = arith.constant 0 : index
    %0 = vector.load %arg1[%c0, %c0_0] : memref<2x32xf32, #tpu.memory_space<vmem>>, vector<2x32xf32>
    %c0_1 = arith.constant 0 : index
    %c0_2 = arith.constant 0 : index
    %1 = vector.load %arg2[%c0_1, %c0_2] : memref<32x128xf32, #tpu.memory_space<vmem>>, vector<32x128xf32>
    %cst = arith.constant dense<0.000000e+00> : vector<2x128xf32>
    %2 = tpu.matmul %0, %1, %cst {dimension_numbers = #tpu.dot_dimension_numbers<[1], [0], [0], [1], [0, 0, 1, 1], [], []>} : vector<2x32xf32>, vector<32x128xf32>, vector<2x128xf32> -> vector<2x128xf32>
    %c0_3 = arith.constant 0 : index
    %c0_4 = arith.constant 0 : index
    %3 = vector.load %arg3[%c0_3, %c0_4] : memref<1x128xf32, #tpu.memory_space<vmem>>, vector<1x128xf32>
    %4 = vector.broadcast %3 : vector<1x128xf32> to vector<2x128xf32>
    %5 = arith.addf %2, %4 : vector<2x128xf32>
    %cst_5 = arith.constant 0.000000e+00 : f32
    %6 = vector.broadcast %cst_5 : f32 to vector<2x128xf32>
    %7 = arith.maximumf %5, %6 : vector<2x128xf32>
    %c0_6 = arith.constant 0 : index
    %c0_7 = arith.constant 0 : index
    %8 = vector.load %arg4[%c0_6, %c0_7] : memref<128x128xf32, #tpu.memory_space<vmem>>, vector<128x128xf32>
    %cst_8 = arith.constant dense<0.000000e+00> : vector<2x128xf32>
    %9 = tpu.matmul %7, %8, %cst_8 {dimension_numbers = #tpu.dot_dimension_numbers<[1], [0], [0], [1], [0, 0, 1, 1], [], []>} : vector<2x128xf32>, vector<128x128xf32>, vector<2x128xf32> -> vector<2x128xf32>
    %c0_9 = arith.constant 0 : index
    %c0_10 = arith.constant 0 : index
    %10 = vector.load %arg5[%c0_9, %c0_10] : memref<1x128xf32, #tpu.memory_space<vmem>>, vector<1x128xf32>
    %11 = vector.broadcast %10 : vector<1x128xf32> to vector<2x128xf32>
    %12 = arith.addf %9, %11 : vector<2x128xf32>
    %cst_11 = arith.constant 0.000000e+00 : f32
    %13 = vector.broadcast %cst_11 : f32 to vector<2x128xf32>
    %14 = arith.maximumf %12, %13 : vector<2x128xf32>
    %c0_12 = arith.constant 0 : index
    %c0_13 = arith.constant 0 : index
    %15 = vector.load %arg6[%c0_12, %c0_13] : memref<128x2xf32, #tpu.memory_space<vmem>>, vector<128x2xf32>
    %cst_14 = arith.constant dense<0.000000e+00> : vector<2x2xf32>
    %16 = tpu.matmul %14, %15, %cst_14 {dimension_numbers = #tpu.dot_dimension_numbers<[1], [0], [0], [1], [0, 0, 1, 1], [], []>} : vector<2x128xf32>, vector<128x2xf32>, vector<2x2xf32> -> vector<2x2xf32>
    %c0_15 = arith.constant 0 : index
    %c0_16 = arith.constant 0 : index
    %17 = vector.load %arg7[%c0_15, %c0_16] : memref<1x2xf32, #tpu.memory_space<vmem>>, vector<1x2xf32>
    %18 = vector.broadcast %17 : vector<1x2xf32> to vector<2x2xf32>
    %19 = arith.addf %16, %18 : vector<2x2xf32>
    %c0_17 = arith.constant 0 : index
    %c0_18 = arith.constant 0 : index
    %20 = vector.load %arg8[%c0_17, %c0_18] : memref<2x2xf32, #tpu.memory_space<vmem>>, vector<2x2xf32>
    tpu.vector_store %arg8[%c0_17, %c0_18], %19 {strides = array<i32>} : memref<2x2xf32, #tpu.memory_space<vmem>>, vector<2x2xf32>,
    return
  }
  func.func @transform_0(%arg0: i32) -> (i32, i32) {
    %c0_i32 = arith.constant 0 : i32
    %c0_i32_0 = arith.constant 0 : i32
    return %arg0, %c0_i32 : i32, i32
  }
  func.func @transform_1(%arg0: i32) -> (i32, i32) {
    %c0_i32 = arith.constant 0 : i32
    %c0_i32_0 = arith.constant 0 : i32
    %c0_i32_1 = arith.constant 0 : i32
    return %c0_i32, %c0_i32_0 : i32, i32
  }
  func.func @transform_2(%arg0: i32) -> (i32, i32) {
    %c0_i32 = arith.constant 0 : i32
    %c0_i32_0 = arith.constant 0 : i32
    %c0_i32_1 = arith.constant 0 : i32
    return %c0_i32, %c0_i32_0 : i32, i32
  }
  func.func @transform_3(%arg0: i32) -> (i32, i32) {
    %c0_i32 = arith.constant 0 : i32
    %c0_i32_0 = arith.constant 0 : i32
    %c0_i32_1 = arith.constant 0 : i32
    return %c0_i32, %c0_i32_0 : i32, i32
  }
  func.func @transform_4(%arg0: i32) -> (i32, i32) {
    %c0_i32 = arith.constant 0 : i32
    %c0_i32_0 = arith.constant 0 : i32
    %c0_i32_1 = arith.constant 0 : i32
    return %c0_i32, %c0_i32_0 : i32, i32
  }
  func.func @transform_5(%arg0: i32) -> (i32, i32) {
    %c0_i32 = arith.constant 0 : i32
    %c0_i32_0 = arith.constant 0 : i32
    %c0_i32_1 = arith.constant 0 : i32
    return %c0_i32, %c0_i32_0 : i32, i32
  }
  func.func @transform_6(%arg0: i32) -> (i32, i32) {
    %c0_i32 = arith.constant 0 : i32
    %c0_i32_0 = arith.constant 0 : i32
    %c0_i32_1 = arith.constant 0 : i32
    return %c0_i32, %c0_i32_0 : i32, i32
  }
  func.func @transform_7(%arg0: i32) -> (i32, i32) {
    %c0_i32 = arith.constant 0 : i32
    %c0_i32_0 = arith.constant 0 : i32
    return %arg0, %c0_i32 : i32, i32
  }
}

</mosaic_0001>

<llo_original>
// kernel: mlp_forward.1
$region0: #{mlp_forward.1}
  #allocation0 [shape = 'u32[]', space=smem, size = 0x4, offset = 0x4, fixed_abs, tag = 'smem constant byte address 0x4 - core index']
  #allocation1 [shape = 'u32[144,128]{1,0:T(1,128)}', space=vmem, size = 0x12000, scoped, tag = 'internal scratch']
  %s0 = inlined_call_operand.vmem [shape: f32[2,32], index: 0, kind: input, shape index: {}]
  %s1 = inlined_call_operand.hbm [shape: f32[32,128], index: 1, kind: input, shape index: {}]
  %s2 = inlined_call_operand.vmem [shape: f32[1,128], index: 2, kind: input, shape index: {}]
  %s3 = inlined_call_operand.vmem [shape: f32[128,128], index: 3, kind: input, shape index: {}]
  %s4 = inlined_call_operand.vmem [shape: f32[1,128], index: 4, kind: input, shape index: {}]
  %s5 = inlined_call_operand.vmem [shape: f32[128,2], index: 5, kind: input, shape index: {}]
  %s6 = inlined_call_operand.vmem [shape: f32[1,2], index: 6, kind: input, shape index: {}]
  %s7 = inlined_call_operand.hbm [shape: f32[2,2], index: 7, kind: output, shape index: {}]
  %s8 = sld [smem:[#allocation0]]
  $region42: #{mlp_forward.1} parent=0
    _
  %s10 = ssub.s32 1, %s8
  %s11 = scalar_select 0, %s10, %s8
  $region1: #{mlp_forward.1} parent=0
    #allocation2 [shape = 'u8[16384]{0}', space=vmem, size = 0x4000, scoped, tag = 'input window, operand 1, single buffered']
    #allocation3 [shape = 's32[1]{0}', space=sflag, size = 0x4, scoped, tag = 'scoped memory for mlp_forward.1']
    #allocation4 [shape = 's32[1]{0}', space=sflag, size = 0x4, scoped, tag = 'scoped memory for mlp_forward.1']
    #allocation5 [shape = 'u8[1024]{0}', space=vmem, size = 0x400, scoped, tag = 'output window, operand 0, single buffered']
    %12 = vsyncpa [#allocation3], 0
    %13 = vsyncpa [#allocation4], 0
    // Predicated region
    $region2: #{mlp_forward.1} parent=1 // pred_check
      _
    $region3: #{mlp_forward.1} parent=1 // pred_check_branch
      %15 = sbr.rel (0) target = $region5
    $region4: #{mlp_forward.1} parent=1 // pred_region
      _
    $region5: #{mlp_forward.1} parent=1 // pred_fallthru
      _
    // Predicated region
    $region6: #{mlp_forward.1} parent=1 // pred_check
      _
    $region7: #{mlp_forward.1} parent=1 // pred_check_branch
      %17 = sbr.rel (0) target = $region9
    $region8: #{mlp_forward.1} parent=1 // pred_region
      %s19 = ssub.s32 512, 512
      %20 = vsyncadd [#allocation3], %s19
      %s21 = sshll.u32 [#allocation2], 4
      %s22 = int_to_ptr.vmem [resolvable:$true] %s21
      %27 = dma.hbm_to_vmem [thread:$0]  %s1, 512, %s22, [#allocation3], 128, 128, 8
    $region9: #{mlp_forward.1} parent=1 // pred_fallthru
      _
    // Predicated region
    $region10: #{mlp_forward.1} parent=1 // pred_check
      _
    $region11: #{mlp_forward.1} parent=1 // pred_check_branch
      %29 = sbr.rel (0) target = $region13
    $region12: #{mlp_forward.1} parent=1 // pred_region
      _
    $region13: #{mlp_forward.1} parent=1 // pred_fallthru
      _
    // Predicated region
    $region14: #{mlp_forward.1} parent=1 // pred_check
      _
    $region15: #{mlp_forward.1} parent=1 // pred_check_branch
      %31 = sbr.rel (0) target = $region17
    $region16: #{mlp_forward.1} parent=1 // pred_region
      _
    $region17: #{mlp_forward.1} parent=1 // pred_fallthru
      _
    // Predicated region
    $region18: #{mlp_forward.1} parent=1 // pred_check
      _
    $region19: #{mlp_forward.1} parent=1 // pred_check_branch
      %33 = sbr.rel (0) target = $region21
    $region20: #{mlp_forward.1} parent=1 // pred_region
      _
    $region21: #{mlp_forward.1} parent=1 // pred_fallthru
      _
    // Predicated region
    $region22: #{mlp_forward.1} parent=1 // pred_check
      _
    $region23: #{mlp_forward.1} parent=1 // pred_check_branch
      %35 = sbr.rel (0) target = $region25
    $region24: #{mlp_forward.1} parent=1 // pred_region
      _
    $region25: #{mlp_forward.1} parent=1 // pred_fallthru
      _
    // Predicated region
    $region26: #{mlp_forward.1} parent=1 // pred_check
      _
    $region27: #{mlp_forward.1} parent=1 // pred_check_branch
      %37 = sbr.rel (0) target = $region29
    $region28: #{mlp_forward.1} parent=1 // pred_region
      _
    $region29: #{mlp_forward.1} parent=1 // pred_fallthru
      _
    // Predicated region
    $region30: #{mlp_forward.1} parent=1 // pred_check
      _
    $region31: #{mlp_forward.1} parent=1 // pred_check_branch
      %39 = sbr.rel (0) target = $region33
    $region32: #{mlp_forward.1} parent=1 // pred_region
      %40 = dma.done [#allocation3], 512
    $region33: #{mlp_forward.1} parent=1 // pred_fallthru
      _
    %v41 = vld [vmem:[%s0] sm:$0x3]
    %v42 = vld [vmem:[#allocation2] sm:$0xff]
    %v43 = vld [vmem:[#allocation2 + $0x8] sm:$0xff]
    %v44 = vld [vmem:[#allocation2 + $0x10] sm:$0xff]
    %v45 = vld [vmem:[#allocation2 + $0x18] sm:$0xff]
    %v46 = vld [vmem:[%s2] sm:$0x1]
    %v48 = vlaneseq
    %v49 = vshrl.u32 %v48, 7
    %v50 = vsub.s32 0, %v49
    %v51 = vrot.slane %v46, %v50
    %vm53 = vcmask 261120
    %v55 = vsel %vm53, %v41, 0
    %57 = vmatprep.subr.mxu0 0.0
    %58 = vmatpush1.msra.mxu0 0.0
    %59 = vmatprep.subr.mxu0 0.0
    %60 = vmatpush1.msra.mxu0 0.0
    %61 = vmatprep.subr.mxu0 0.0
    %62 = vmatpush1.msra.mxu0 0.0
    %63 = vmatprep.subr.mxu0 0.0
    %64 = vmatpush1.msra.mxu0 0.0
    %65 = vmatprep.subr.mxu0 0.0
    %66 = vmatpush1.msra.mxu0 0.0
    %67 = vmatprep.subr.mxu0 0.0
    %68 = vmatpush1.msra.mxu0 0.0
    %69 = vmatprep.subr.mxu0 0.0
    %70 = vmatpush1.msra.mxu0 0.0
    %71 = vmatprep.subr.mxu0 0.0
    %72 = vmatpush1.msra.mxu0 0.0
    %73 = vmatprep.subr.mxu0 0.0
    %74 = vmatpush1.msra.mxu0 0.0
    %75 = vmatprep.subr.mxu0 0.0
    %76 = vmatpush1.msra.mxu0 0.0
    %77 = vmatprep.subr.mxu0 0.0
    %78 = vmatpush1.msra.mxu0 0.0
    %79 = vmatprep.subr.mxu0 0.0
    %80 = vmatpush1.msra.mxu0 0.0
    %81 = vmatprep.subr.mxu0 0.0
    %82 = vmatpush1.msra.mxu0 %v45
    %83 = vmatprep.subr.mxu0 0.0
    %84 = vmatpush1.msra.mxu0 %v44
    %85 = vmatprep.subr.mxu0 0.0
    %86 = vmatpush1.msra.mxu0 %v43
    %87 = vmatprep.subr.mxu0 0.0
    %88 = vmatpush1.msra.mxu0 %v42
    %89 = vmatprep.subr.mxu0 0.0
    %90 = vmatpush2.msra.mxu0 0.0
    %91 = vmatprep.subr.mxu0 0.0
    %92 = vmatpush2.msra.mxu0 0.0
    %93 = vmatprep.subr.mxu0 0.0
    %94 = vmatpush2.msra.mxu0 0.0
    %95 = vmatprep.subr.mxu0 0.0
    %96 = vmatpush2.msra.mxu0 0.0
    %97 = vmatprep.subr.mxu0 0.0
    %98 = vmatpush2.msra.mxu0 0.0
    %99 = vmatprep.subr.mxu0 0.0
    %100 = vmatpush2.msra.mxu0 0.0
    %101 = vmatprep.subr.mxu0 0.0
    %102 = vmatpush2.msra.mxu0 0.0
    %103 = vmatprep.subr.mxu0 0.0
    %104 = vmatpush2.msra.mxu0 0.0
    %105 = vmatprep.subr.mxu0 0.0
    %106 = vmatpush2.msra.mxu0 0.0
    %107 = vmatprep.subr.mxu0 0.0
    %108 = vmatpush2.msra.mxu0 0.0
    %109 = vmatprep.subr.mxu0 0.0
    %110 = vmatpush2.msra.mxu0 0.0
    %111 = vmatprep.subr.mxu0 0.0
    %112 = vmatpush2.msra.mxu0 0.0
    %113 = vmatprep.subr.mxu0 0.0
    %114 = vmatpush2.msra.mxu0 0.0
    %115 = vmatprep.subr.mxu0 0.0
    %116 = vmatpush2.msra.mxu0 0.0
    %117 = vmatprep.subr.mxu0 0.0
    %118 = vmatpush2.msra.mxu0 0.0
    %119 = vmatprep.subr.mxu0 0.0
    %120 = vmatpush2.msra.mxu0 0.0
    %121 = vmatprep.mubr.f32.mxu0 0.0
    %122 = vmatmul.mubr.f32.gmra.mxu0 %v55
    %v123 = vpop.f32.mrf.mxu0
    %v124 = vadd.f32 %v51, %v123
    %v125 = vpop.f32.mrf.mxu0
    %126 = vdwg.mxu0
    %v127 = vmax.f32 %v124, 0.0
    %v128 = vld [vmem:[%s3] sm:$0xff]
    %v129 = vld [vmem:[%s3 + $0x8] sm:$0xff]
    %v130 = vld [vmem:[%s3 + $0x10] sm:$0xff]
    %v131 = vld [vmem:[%s3 + $0x18] sm:$0xff]
    %v132 = vld [vmem:[%s3 + $0x20] sm:$0xff]
    %v133 = vld [vmem:[%s3 + $0x28] sm:$0xff]
    %v134 = vld [vmem:[%s3 + $0x30] sm:$0xff]
    %v135 = vld [vmem:[%s3 + $0x38] sm:$0xff]
    %v136 = vld [vmem:[%s3 + $0x40] sm:$0xff]
    %v137 = vld [vmem:[%s3 + $0x48] sm:$0xff]
    %v138 = vld [vmem:[%s3 + $0x50] sm:$0xff]
    %v139 = vld [vmem:[%s3 + $0x58] sm:$0xff]
    %v140 = vld [vmem:[%s3 + $0x60] sm:$0xff]
    %v141 = vld [vmem:[%s3 + $0x68] sm:$0xff]
    %v142 = vld [vmem:[%s3 + $0x70] sm:$0xff]
    %v143 = vld [vmem:[%s3 + $0x78] sm:$0xff]
    %v144 = vld [vmem:[%s4] sm:$0x1]
    %v146 = vlaneseq
    %v147 = vshrl.u32 %v146, 7
    %v148 = vsub.s32 0, %v147
    %v149 = vrot.slane %v144, %v148
    %151 = vmatprep.subr.mxu0 0.0
    %152 = vmatpush1.msra.mxu0 %v143
    %153 = vmatprep.subr.mxu0 0.0
    %154 = vmatpush1.msra.mxu0 %v142
    %155 = vmatprep.subr.mxu0 0.0
    %156 = vmatpush1.msra.mxu0 %v141
    %157 = vmatprep.subr.mxu0 0.0
    %158 = vmatpush1.msra.mxu0 %v140
    %159 = vmatprep.subr.mxu0 0.0
    %160 = vmatpush1.msra.mxu0 %v139
    %161 = vmatprep.subr.mxu0 0.0
    %162 = vmatpush1.msra.mxu0 %v138
    %163 = vmatprep.subr.mxu0 0.0
    %164 = vmatpush1.msra.mxu0 %v137
    %165 = vmatprep.subr.mxu0 0.0
    %166 = vmatpush1.msra.mxu0 %v136
    %167 = vmatprep.subr.mxu0 0.0
    %168 = vmatpush1.msra.mxu0 %v135
    %169 = vmatprep.subr.mxu0 0.0
    %170 = vmatpush1.msra.mxu0 %v134
    %171 = vmatprep.subr.mxu0 0.0
    %172 = vmatpush1.msra.mxu0 %v133
    %173 = vmatprep.subr.mxu0 0.0
    %174 = vmatpush1.msra.mxu0 %v132
    %175 = vmatprep.subr.mxu0 0.0
    %176 = vmatpush1.msra.mxu0 %v131
    %177 = vmatprep.subr.mxu0 0.0
    %178 = vmatpush1.msra.mxu0 %v130
    %179 = vmatprep.subr.mxu0 0.0
    %180 = vmatpush1.msra.mxu0 %v129
    %181 = vmatprep.subr.mxu0 0.0
    %182 = vmatpush1.msra.mxu0 %v128
    %183 = vmatprep.subr.mxu0 0.0
    %184 = vmatpush2.msra.mxu0 0.0
    %185 = vmatprep.subr.mxu0 0.0
    %186 = vmatpush2.msra.mxu0 0.0
    %187 = vmatprep.subr.mxu0 0.0
    %188 = vmatpush2.msra.mxu0 0.0
    %189 = vmatprep.subr.mxu0 0.0
    %190 = vmatpush2.msra.mxu0 0.0
    %191 = vmatprep.subr.mxu0 0.0
    %192 = vmatpush2.msra.mxu0 0.0
    %193 = vmatprep.subr.mxu0 0.0
    %194 = vmatpush2.msra.mxu0 0.0
    %195 = vmatprep.subr.mxu0 0.0
    %196 = vmatpush2.msra.mxu0 0.0
    %197 = vmatprep.subr.mxu0 0.0
    %198 = vmatpush2.msra.mxu0 0.0
    %199 = vmatprep.subr.mxu0 0.0
    %200 = vmatpush2.msra.mxu0 0.0
    %201 = vmatprep.subr.mxu0 0.0
    %202 = vmatpush2.msra.mxu0 0.0
    %203 = vmatprep.subr.mxu0 0.0
    %204 = vmatpush2.msra.mxu0 0.0
    %205 = vmatprep.subr.mxu0 0.0
    %206 = vmatpush2.msra.mxu0 0.0
    %207 = vmatprep.subr.mxu0 0.0
    %208 = vmatpush2.msra.mxu0 0.0
    %209 = vmatprep.subr.mxu0 0.0
    %210 = vmatpush2.msra.mxu0 0.0
    %211 = vmatprep.subr.mxu0 0.0
    %212 = vmatpush2.msra.mxu0 0.0
    %213 = vmatprep.subr.mxu0 0.0
    %214 = vmatpush2.msra.mxu0 0.0
    %215 = vmatprep.mubr.f32.mxu0 0.0
    %216 = vmatmul.mubr.f32.gmra.mxu0 %v127
    %v217 = vpop.f32.mrf.mxu0
    %v218 = vadd.f32 %v149, %v217
    %v219 = vpop.f32.mrf.mxu0
    %220 = vdwg.mxu0
    %v221 = vmax.f32 %v218, 0.0
    %v222 = vld [vmem:[%s5] sm:$0xff]
    %v223 = vld [vmem:[%s5 + $0x8] sm:$0xff]
    %v224 = vld [vmem:[%s5 + $0x10] sm:$0xff]
    %v225 = vld [vmem:[%s5 + $0x18] sm:$0xff]
    %v226 = vld [vmem:[%s5 + $0x20] sm:$0xff]
    %v227 = vld [vmem:[%s5 + $0x28] sm:$0xff]
    %v228 = vld [vmem:[%s5 + $0x30] sm:$0xff]
    %v229 = vld [vmem:[%s5 + $0x38] sm:$0xff]
    %v230 = vld [vmem:[%s5 + $0x40] sm:$0xff]
    %v231 = vld [vmem:[%s5 + $0x48] sm:$0xff]
    %v232 = vld [vmem:[%s5 + $0x50] sm:$0xff]
    %v233 = vld [vmem:[%s5 + $0x58] sm:$0xff]
    %v234 = vld [vmem:[%s5 + $0x60] sm:$0xff]
    %v235 = vld [vmem:[%s5 + $0x68] sm:$0xff]
    %v236 = vld [vmem:[%s5 + $0x70] sm:$0xff]
    %v237 = vld [vmem:[%s5 + $0x78] sm:$0xff]
    %v238 = vld [vmem:[%s6] sm:$0x1]
    %v240 = vlaneseq
    %v241 = vshrl.u32 %v240, 7
    %v242 = vsub.s32 0, %v241
    %v243 = vrot.slane %v238, %v242
    %245 = vmatprep.subr.mxu0 0.0
    %246 = vmatpush1.msra.mxu0 %v237
    %247 = vmatprep.subr.mxu0 0.0
    %248 = vmatpush1.msra.mxu0 %v236
    %249 = vmatprep.subr.mxu0 0.0
    %250 = vmatpush1.msra.mxu0 %v235
    %251 = vmatprep.subr.mxu0 0.0
    %252 = vmatpush1.msra.mxu0 %v234
    %253 = vmatprep.subr.mxu0 0.0
    %254 = vmatpush1.msra.mxu0 %v233
    %255 = vmatprep.subr.mxu0 0.0
    %256 = vmatpush1.msra.mxu0 %v232
    %257 = vmatprep.subr.mxu0 0.0
    %258 = vmatpush1.msra.mxu0 %v231
    %259 = vmatprep.subr.mxu0 0.0
    %260 = vmatpush1.msra.mxu0 %v230
    %261 = vmatprep.subr.mxu0 0.0
    %262 = vmatpush1.msra.mxu0 %v229
    %263 = vmatprep.subr.mxu0 0.0
    %264 = vmatpush1.msra.mxu0 %v228
    %265 = vmatprep.subr.mxu0 0.0
    %266 = vmatpush1.msra.mxu0 %v227
    %267 = vmatprep.subr.mxu0 0.0
    %268 = vmatpush1.msra.mxu0 %v226
    %269 = vmatprep.subr.mxu0 0.0
    %270 = vmatpush1.msra.mxu0 %v225
    %271 = vmatprep.subr.mxu0 0.0
    %272 = vmatpush1.msra.mxu0 %v224
    %273 = vmatprep.subr.mxu0 0.0
    %274 = vmatpush1.msra.mxu0 %v223
    %275 = vmatprep.subr.mxu0 0.0
    %276 = vmatpush1.msra.mxu0 %v222
    %277 = vmatprep.subr.mxu0 0.0
    %278 = vmatpush2.msra.mxu0 0.0
    %279 = vmatprep.subr.mxu0 0.0
    %280 = vmatpush2.msra.mxu0 0.0
    %281 = vmatprep.subr.mxu0 0.0
    %282 = vmatpush2.msra.mxu0 0.0
    %283 = vmatprep.subr.mxu0 0.0
    %284 = vmatpush2.msra.mxu0 0.0
    %285 = vmatprep.subr.mxu0 0.0
    %286 = vmatpush2.msra.mxu0 0.0
    %287 = vmatprep.subr.mxu0 0.0
    %288 = vmatpush2.msra.mxu0 0.0
    %289 = vmatprep.subr.mxu0 0.0
    %290 = vmatpush2.msra.mxu0 0.0
    %291 = vmatprep.subr.mxu0 0.0
    %292 = vmatpush2.msra.mxu0 0.0
    %293 = vmatprep.subr.mxu0 0.0
    %294 = vmatpush2.msra.mxu0 0.0
    %295 = vmatprep.subr.mxu0 0.0
    %296 = vmatpush2.msra.mxu0 0.0
    %297 = vmatprep.subr.mxu0 0.0
    %298 = vmatpush2.msra.mxu0 0.0
    %299 = vmatprep.subr.mxu0 0.0
    %300 = vmatpush2.msra.mxu0 0.0
    %301 = vmatprep.subr.mxu0 0.0
    %302 = vmatpush2.msra.mxu0 0.0
    %303 = vmatprep.subr.mxu0 0.0
    %304 = vmatpush2.msra.mxu0 0.0
    %305 = vmatprep.subr.mxu0 0.0
    %306 = vmatpush2.msra.mxu0 0.0
    %307 = vmatprep.subr.mxu0 0.0
    %308 = vmatpush2.msra.mxu0 0.0
    %309 = vmatprep.mubr.f32.mxu0 0.0
    %310 = vmatmul.mubr.f32.gmra.mxu0 %v221
    %v311 = vpop.f32.mrf.mxu0
    %v312 = vadd.f32 %v243, %v311
    %v313 = vpop.f32.mrf.mxu0
    %314 = vdwg.mxu0
    %vm315 = vcmask 9216
    %316 = vst.msk [vmem:[#allocation5] sm:$0x3] %vm315, %v312
    // Predicated region
    $region34: #{mlp_forward.1} parent=1 // pred_check
      _
    $region35: #{mlp_forward.1} parent=1 // pred_check_branch
      %318 = sbr.rel (0) target = $region37
    $region36: #{mlp_forward.1} parent=1 // pred_region
      %s320 = ssub.s32 32, 32
      %321 = vsyncadd [#allocation4], %s320
      %s323 = sshll.u32 [#allocation5], 4
      %s324 = int_to_ptr.vmem [resolvable:$true] %s323
      %326 = dma.vmem_to_hbm [thread:$0]  %s324, 32, %s7, [#allocation4]
    $region37: #{mlp_forward.1} parent=1 // pred_fallthru
      _
    // Predicated region
    $region38: #{mlp_forward.1} parent=1 // pred_check
      _
    $region39: #{mlp_forward.1} parent=1 // pred_check_branch
      %328 = sbr.rel (0) target = $region41
    $region40: #{mlp_forward.1} parent=1 // pred_region
      %329 = dma.done [#allocation4], 32
    $region41: #{mlp_forward.1} parent=1 // pred_fallthru
      _
    %330 = vsyncpa [#allocation3], 1
    %331 = vsyncpa [#allocation4], 1

</llo_original>
